<compile_context>
chip_gen: v5e
topology: v5e:2x2
jax: 0.10.0
libtpu: 0.0.40
codegen_flags: <defaults>
</compile_context>

<pallas_src>
import functools
import math

import jax
import jax.numpy as jnp
from jax.experimental import pallas as pl
from jax.experimental.pallas import tpu as pltpu


# ----------------------------- model config ---------------------------------
INPUT_SIZE = (4,)      # input_size tuple
OUTPUT_SIZE = (3,)     # output_size tuple
N_BASIS = 8
HIDDEN_SIZE = 32
RANK = 8
N_LAYERS = 3
LEARN_BASIS_FUNCTIONS = True


def _round_up(n, m):
    return ((n + m - 1) // m) * m


def mmnn_fc_sizes(input_size, output_size, n_basis, hidden_size, rank, n_layers,
                  learn_basis_functions=True):
    """Replicates the fc size bookkeeping from MMNN.__init__."""
    d_in = input_size[0]
    d_out = output_size[0] * n_basis if learn_basis_functions else output_size[0]
    ranks = [d_in] + [rank] * (n_layers - 1) + [d_out]
    widths = [hidden_size] * n_layers
    fc_sizes = [ranks[0]]
    for j in range(n_layers):
        fc_sizes += [widths[j], ranks[j + 1]]
    return fc_sizes


def init_params(key, fc_sizes):
    """Deterministic init mimicking nn.Linear's default bound scheme.

    Weights stored PyTorch-native as (out, in); biases as (out,).
    """
    params = []
    for j in range(len(fc_sizes) - 1):
        fan_in, fan_out = fc_sizes[j], fc_sizes[j + 1]
        key, kw, kb = jax.random.split(key, 3)
        bound = math.sqrt(1.0 / fan_in)
        W = jax.random.uniform(kw, (fan_out, fan_in), jnp.float32,
                               minval=-bound, maxval=bound)
        b = jax.random.uniform(kb, (fan_out,), jnp.float32,
                               minval=-bound, maxval=bound)
        params.append((W, b))
    return params


def _fuse_params(params, n_layers):
    """Fuse each activation-free linear with the next layer's pre-activation linear."""
    A = [params[2 * j][0] for j in range(n_layers)]       # (hidden, rank_j)
    a = [params[2 * j][1] for j in range(n_layers)]       # (hidden,)
    B = [params[2 * j + 1][0] for j in range(n_layers)]   # (rank_{j+1}, hidden)
    b = [params[2 * j + 1][1] for j in range(n_layers)]   # (rank_{j+1},)

    w_first = A[0]                                         # (hidden, d_in)
    b_first = a[0][:, None]                                # (hidden, 1)
    if n_layers > 1:
        w_mid = jnp.stack([A[j] @ B[j - 1] for j in range(1, n_layers)])
        b_mid = jnp.stack([A[j] @ b[j - 1][:, None] + a[j][:, None]
                           for j in range(1, n_layers)])
    else:
        w_mid = b_mid = None
    w_last = B[-1]                                         # (d_out, hidden)
    b_last = b[-1][:, None]                                # (d_out, 1)
    return w_first, b_first, w_mid, b_mid, w_last, b_last


# ------------------------------ Pallas kernel --------------------------------
def _mmnn_kernel(n_mid, *refs):
    """Lane-dense fused MMNN block.

    refs = (x_ref, w_first, b_first, [w_mid, b_mid,] w_last, b_last, out_ref)
    x_ref:   (d_in, row_tile)        w_first: (hidden, d_in)   b_first: (hidden, 1)
    w_mid:   (n_mid, hidden, hidden) b_mid:   (n_mid, hidden, 1)
    w_last:  (d_out, hidden)         b_last:  (d_out, 1)
    out_ref: (d_out, row_tile)
    """
    if n_mid > 0:
        x_ref, wf_ref, bf_ref, wm_ref, bm_ref, wl_ref, bl_ref, out_ref = refs
    else:
        x_ref, wf_ref, bf_ref, wl_ref, bl_ref, out_ref = refs
        wm_ref = bm_ref = None

    h = jnp.dot(wf_ref[...], x_ref[...], preferred_element_type=jnp.float32)
    h = jnp.maximum(h + bf_ref[...], 0.0)                  # relu
    for j in range(n_mid):                                 # fused hidden->hidden relu-linears
        h = jnp.dot(wm_ref[j], h, preferred_element_type=jnp.float32)
        h = jnp.maximum(h + bm_ref[j], 0.0)
    out = jnp.dot(wl_ref[...], h, preferred_element_type=jnp.float32) + bl_ref[...]
    out_ref[...] = out.astype(out_ref.dtype)


def mmnn_forward(x, params, *, n_layers=N_LAYERS, output_size=OUTPUT_SIZE,
                 n_basis=N_BASIS, learn_basis_functions=LEARN_BASIS_FUNCTIONS,
                 row_tile=2048):
    """Full MMNN.forward with the linear-layer chain in a single Pallas kernel."""
    d_in = params[0][0].shape[1]
    d_out = params[-1][0].shape[0]
    assert x.shape[-1] == d_in, f"Expected input size {d_in}, got {x.shape[-1]}"

    # --- mirror the reshape bookkeeping of MMNN.forward ---
    reshape = None
    if x.ndim == 1:
        reshape = 1
        x = x.reshape(1, 1, -1)
    if x.ndim == 2:
        reshape = 2
        x = x[None, ...]
    B, P, _ = x.shape
    N = B * P

    # Lane-dense layout: rows on the (fast) 128-lane axis.
    x_t = x.reshape(N, d_in).astype(jnp.float32).T                  # (d_in, N)
    row_tile = min(row_tile, _round_up(N, 128))                     # multiple of 128
    Nt = _round_up(N, row_tile)
    if Nt != N:
        x_t = jnp.pad(x_t, ((0, 0), (0, Nt - N)))
    grid = (Nt // row_tile,)

    w_first, b_first, w_mid, b_mid, w_last, b_last = _fuse_params(params, n_layers)
    n_mid = n_layers - 1

    in_specs = [pl.BlockSpec((d_in, row_tile), lambda i: (0, i)),
                pl.BlockSpec(w_first.shape, lambda i: (0, 0)),
                pl.BlockSpec(b_first.shape, lambda i: (0, 0))]
    args = [x_t, w_first, b_first]
    if n_mid > 0:
        in_specs += [pl.BlockSpec(w_mid.shape, lambda i: (0, 0, 0)),
                     pl.BlockSpec(b_mid.shape, lambda i: (0, 0, 0))]
        args += [w_mid, b_mid]
    in_specs += [pl.BlockSpec(w_last.shape, lambda i: (0, 0)),
                 pl.BlockSpec(b_last.shape, lambda i: (0, 0))]
    args += [w_last, b_last]

    out_t = pl.pallas_call(
        functools.partial(_mmnn_kernel, n_mid),
        out_shape=jax.ShapeDtypeStruct((d_out, Nt), jnp.float32),
        grid_spec=pltpu.PrefetchScalarGridSpec(
            num_scalar_prefetch=0,
            grid=grid,
            in_specs=in_specs,
            out_specs=pl.BlockSpec((d_out, row_tile), lambda i: (0, i)),
        ),
        compiler_params=pltpu.CompilerParams(
            dimension_semantics=("parallel",)),
    )(*args)

    out_flat = out_t[:, :N].T                                        # (N, d_out)
    if learn_basis_functions:
        Gs = out_flat.reshape(B, P, *output_size, n_basis)
    else:
        Gs = out_flat.reshape(B, P, *output_size)
    if reshape == 1:
        Gs = Gs[0, 0]
    if reshape == 2:
        Gs = Gs[0]
    return Gs


# ------------------------------ reference -----------------------------------
def mmnn_reference(x, params, *, n_layers=N_LAYERS, output_size=OUTPUT_SIZE,
                   n_basis=N_BASIS, learn_basis_functions=LEARN_BASIS_FUNCTIONS):
    """Pure-JAX reference mirroring the PyTorch forward (unfused)."""
    reshape = None
    if x.ndim == 1:
        reshape = 1
        x = x.reshape(1, 1, -1)
    if x.ndim == 2:
        reshape = 2
        x = x[None, ...]
    h = x.astype(jnp.float32)
    for j in range(n_layers):
        W, b = params[2 * j]
        h = jnp.maximum(h @ W.T + b, 0.0)
        W, b = params[2 * j + 1]
        h = h @ W.T + b
    if learn_basis_functions:
        Gs = h.reshape(*x.shape[:2], *output_size, n_basis)
    else:
        Gs = h.reshape(*x.shape[:2], *output_size)
    if reshape == 1:
        Gs = Gs[0, 0]
    if reshape == 2:
        Gs = Gs[0]
    return Gs


# --------------------------------- main --------------------------------------
if __name__ == "__main__":
    key = jax.random.PRNGKey(0)
    k_param, k_x1, k_x2 = jax.random.split(key, 3)

    fc_sizes = mmnn_fc_sizes(INPUT_SIZE, OUTPUT_SIZE, N_BASIS, HIDDEN_SIZE,
                             RANK, N_LAYERS, LEARN_BASIS_FUNCTIONS)
    params = init_params(k_param, fc_sizes)

    # Small example: batch=2, points=8, input_size=4 -> output (2, 8, 3, 8)
    x = jax.random.normal(k_x1, (2, 8, INPUT_SIZE[0]), dtype=jnp.float32)
    out = jax.block_until_ready(mmnn_forward(x, params))
    ref = mmnn_reference(x, params)
    assert out.shape == (2, 8, OUTPUT_SIZE[0], N_BASIS), out.shape
    assert jnp.allclose(out, ref, atol=1e-4, rtol=1e-5), "mismatch vs reference"

    # Second check: enough rows to exercise multiple grid tiles + ragged padding.
    x2 = jax.random.normal(k_x2, (4, 700, INPUT_SIZE[0]), dtype=jnp.float32)
    out2 = jax.block_until_ready(mmnn_forward(x2, params))
    ref2 = mmnn_reference(x2, params)
    assert out2.shape == (4, 700, OUTPUT_SIZE[0], N_BASIS), out2.shape
    assert jnp.allclose(out2, ref2, atol=1e-4, rtol=1e-5), "mismatch vs reference (multi-tile)"

    print("KERNEL_OK")
</pallas_src>

<mosaic_0001>
module attributes {stable_mosaic.version = 11 : i64} {
  func.func @_mmnn_kernel(%arg0: i32, %arg1: memref<4x128xf32, #tpu.memory_space<vmem>>, %arg2: memref<32x4xf32, #tpu.memory_space<vmem>>, %arg3: memref<32x1xf32, #tpu.memory_space<vmem>>, %arg4: memref<2x32x32xf32, #tpu.memory_space<vmem>>, %arg5: memref<2x32x1xf32, #tpu.memory_space<vmem>>, %arg6: memref<24x32xf32, #tpu.memory_space<vmem>>, %arg7: memref<24x1xf32, #tpu.memory_space<vmem>>, %arg8: memref<24x128xf32, #tpu.memory_space<vmem>>) attributes {dimension_semantics = [#tpu.dimension_semantics<parallel>], iteration_bounds = array<i64: 1>, scalar_prefetch = 0 : i64, scratch_operands = 0 : i64, tpu.core_type = #tpu.core_type<tc>, window_params = [{transform_indices = @transform_0, window_bounds = array<i64: 4, 128>}, {pipeline_mode = #tpu.pipeline_mode<synchronous>, transform_indices = @transform_1, window_bounds = array<i64: 32, 4>}, {pipeline_mode = #tpu.pipeline_mode<synchronous>, transform_indices = @transform_2, window_bounds = array<i64: 32, 1>}, {pipeline_mode = #tpu.pipeline_mode<synchronous>, transform_indices = @transform_3, window_bounds = array<i64: 2, 32, 32>}, {pipeline_mode = #tpu.pipeline_mode<synchronous>, transform_indices = @transform_4, window_bounds = array<i64: 2, 32, 1>}, {pipeline_mode = #tpu.pipeline_mode<synchronous>, transform_indices = @transform_5, window_bounds = array<i64: 24, 32>}, {pipeline_mode = #tpu.pipeline_mode<synchronous>, transform_indices = @transform_6, window_bounds = array<i64: 24, 1>}, {transform_indices = @transform_7, window_bounds = array<i64: 24, 128>}]} {
    %c0 = arith.constant 0 : index
    %c0_0 = arith.constant 0 : index
    %0 = vector.load %arg2[%c0, %c0_0] : memref<32x4xf32, #tpu.memory_space<vmem>>, vector<32x4xf32>
    %c0_1 = arith.constant 0 : index
    %c0_2 = arith.constant 0 : index
    %1 = vector.load %arg1[%c0_1, %c0_2] : memref<4x128xf32, #tpu.memory_space<vmem>>, vector<4x128xf32>
    %cst = arith.constant dense<0.000000e+00> : vector<32x128xf32>
    %2 = tpu.matmul %0, %1, %cst {dimension_numbers = #tpu.dot_dimension_numbers<[1], [0], [0], [1], [0, 0, 1, 1], [], []>} : vector<32x4xf32>, vector<4x128xf32>, vector<32x128xf32> -> vector<32x128xf32>
    %c0_3 = arith.constant 0 : index
    %c0_4 = arith.constant 0 : index
    %3 = vector.load %arg3[%c0_3, %c0_4] : memref<32x1xf32, #tpu.memory_space<vmem>>, vector<32x1xf32>
    %4 = vector.broadcast %3 : vector<32x1xf32> to vector<32x128xf32>
    %5 = arith.addf %2, %4 : vector<32x128xf32>
    %cst_5 = arith.constant 0.000000e+00 : f32
    %6 = vector.broadcast %cst_5 : f32 to vector<32x128xf32>
    %7 = arith.maximumf %5, %6 : vector<32x128xf32>
    %c0_6 = arith.constant 0 : index
    %c0_7 = arith.constant 0 : index
    %c0_8 = arith.constant 0 : index
    %8 = vector.load %arg4[%c0_6, %c0_7, %c0_8] : memref<2x32x32xf32, #tpu.memory_space<vmem>>, vector<1x32x32xf32>
    %9 = vector.shape_cast %8 : vector<1x32x32xf32> to vector<32x32xf32>
    %cst_9 = arith.constant dense<0.000000e+00> : vector<32x128xf32>
    %10 = tpu.matmul %9, %7, %cst_9 {dimension_numbers = #tpu.dot_dimension_numbers<[1], [0], [0], [1], [0, 0, 1, 1], [], []>} : vector<32x32xf32>, vector<32x128xf32>, vector<32x128xf32> -> vector<32x128xf32>
    %c0_10 = arith.constant 0 : index
    %c0_11 = arith.constant 0 : index
    %c0_12 = arith.constant 0 : index
    %11 = vector.load %arg5[%c0_10, %c0_11, %c0_12] : memref<2x32x1xf32, #tpu.memory_space<vmem>>, vector<1x32x1xf32>
    %12 = vector.shape_cast %11 : vector<1x32x1xf32> to vector<32x1xf32>
    %13 = vector.broadcast %12 : vector<32x1xf32> to vector<32x128xf32>
    %14 = arith.addf %10, %13 : vector<32x128xf32>
    %cst_13 = arith.constant 0.000000e+00 : f32
    %15 = vector.broadcast %cst_13 : f32 to vector<32x128xf32>
    %16 = arith.maximumf %14, %15 : vector<32x128xf32>
    %c1 = arith.constant 1 : index
    %c0_14 = arith.constant 0 : index
    %c0_15 = arith.constant 0 : index
    %17 = vector.load %arg4[%c1, %c0_14, %c0_15] : memref<2x32x32xf32, #tpu.memory_space<vmem>>, vector<1x32x32xf32>
    %18 = vector.shape_cast %17 : vector<1x32x32xf32> to vector<32x32xf32>
    %cst_16 = arith.constant dense<0.000000e+00> : vector<32x128xf32>
    %19 = tpu.matmul %18, %16, %cst_16 {dimension_numbers = #tpu.dot_dimension_numbers<[1], [0], [0], [1], [0, 0, 1, 1], [], []>} : vector<32x32xf32>, vector<32x128xf32>, vector<32x128xf32> -> vector<32x128xf32>
    %c1_17 = arith.constant 1 : index
    %c0_18 = arith.constant 0 : index
    %c0_19 = arith.constant 0 : index
    %20 = vector.load %arg5[%c1_17, %c0_18, %c0_19] : memref<2x32x1xf32, #tpu.memory_space<vmem>>, vector<1x32x1xf32>
    %21 = vector.shape_cast %20 : vector<1x32x1xf32> to vector<32x1xf32>
    %22 = vector.broadcast %21 : vector<32x1xf32> to vector<32x128xf32>
    %23 = arith.addf %19, %22 : vector<32x128xf32>
    %cst_20 = arith.constant 0.000000e+00 : f32
    %24 = vector.broadcast %cst_20 : f32 to vector<32x128xf32>
    %25 = arith.maximumf %23, %24 : vector<32x128xf32>
    %c0_21 = arith.constant 0 : index
    %c0_22 = arith.constant 0 : index
    %26 = vector.load %arg6[%c0_21, %c0_22] : memref<24x32xf32, #tpu.memory_space<vmem>>, vector<24x32xf32>
    %cst_23 = arith.constant dense<0.000000e+00> : vector<24x128xf32>
    %27 = tpu.matmul %26, %25, %cst_23 {dimension_numbers = #tpu.dot_dimension_numbers<[1], [0], [0], [1], [0, 0, 1, 1], [], []>} : vector<24x32xf32>, vector<32x128xf32>, vector<24x128xf32> -> vector<24x128xf32>
    %c0_24 = arith.constant 0 : index
    %c0_25 = arith.constant 0 : index
    %28 = vector.load %arg7[%c0_24, %c0_25] : memref<24x1xf32, #tpu.memory_space<vmem>>, vector<24x1xf32>
    %29 = vector.broadcast %28 : vector<24x1xf32> to vector<24x128xf32>
    %30 = arith.addf %27, %29 : vector<24x128xf32>
    %c0_26 = arith.constant 0 : index
    %c0_27 = arith.constant 0 : index
    %31 = vector.load %arg8[%c0_26, %c0_27] : memref<24x128xf32, #tpu.memory_space<vmem>>, vector<24x128xf32>
    tpu.vector_store %arg8[%c0_26, %c0_27], %30 {strides = array<i32>} : memref<24x128xf32, #tpu.memory_space<vmem>>, vector<24x128xf32>,
    return
  }
  func.func @transform_0(%arg0: i32) -> (i32, i32) {
    %c0_i32 = arith.constant 0 : i32
    %c0_i32_0 = arith.constant 0 : i32
    return %c0_i32, %arg0 : i32, i32
  }
  func.func @transform_1(%arg0: i32) -> (i32, i32) {
    %c0_i32 = arith.constant 0 : i32
    %c0_i32_0 = arith.constant 0 : i32
    %c0_i32_1 = arith.constant 0 : i32
    return %c0_i32, %c0_i32_0 : i32, i32
  }
  func.func @transform_2(%arg0: i32) -> (i32, i32) {
    %c0_i32 = arith.constant 0 : i32
    %c0_i32_0 = arith.constant 0 : i32
    %c0_i32_1 = arith.constant 0 : i32
    return %c0_i32, %c0_i32_0 : i32, i32
  }
  func.func @transform_3(%arg0: i32) -> (i32, i32, i32) {
    %c0_i32 = arith.constant 0 : i32
    %c0_i32_0 = arith.constant 0 : i32
    %c0_i32_1 = arith.constant 0 : i32
    %c0_i32_2 = arith.constant 0 : i32
    return %c0_i32, %c0_i32_0, %c0_i32_1 : i32, i32, i32
  }
  func.func @transform_4(%arg0: i32) -> (i32, i32, i32) {
    %c0_i32 = arith.constant 0 : i32
    %c0_i32_0 = arith.constant 0 : i32
    %c0_i32_1 = arith.constant 0 : i32
    %c0_i32_2 = arith.constant 0 : i32
    return %c0_i32, %c0_i32_0, %c0_i32_1 : i32, i32, i32
  }
  func.func @transform_5(%arg0: i32) -> (i32, i32) {
    %c0_i32 = arith.constant 0 : i32
    %c0_i32_0 = arith.constant 0 : i32
    %c0_i32_1 = arith.constant 0 : i32
    return %c0_i32, %c0_i32_0 : i32, i32
  }
  func.func @transform_6(%arg0: i32) -> (i32, i32) {
    %c0_i32 = arith.constant 0 : i32
    %c0_i32_0 = arith.constant 0 : i32
    %c0_i32_1 = arith.constant 0 : i32
    return %c0_i32, %c0_i32_0 : i32, i32
  }
  func.func @transform_7(%arg0: i32) -> (i32, i32) {
    %c0_i32 = arith.constant 0 : i32
    %c0_i32_0 = arith.constant 0 : i32
    return %c0_i32, %arg0 : i32, i32
  }
}

</mosaic_0001>

<llo_original>
// kernel: tpu_custom_call.1
$region0: #{tpu_custom_call.1}
  #allocation0 [shape = 'u32[]', space=smem, size = 0x4, offset = 0x4, fixed_abs, tag = 'smem constant byte address 0x4 - core index']
  #allocation1 [shape = 'u32[72,128]{1,0:T(1,128)}', space=vmem, size = 0x9000, scoped, tag = 'internal scratch']
  %s0 = inlined_call_operand.vmem [shape: f32[4,128], index: 0, kind: input, shape index: {}]
  %s1 = inlined_call_operand.vmem [shape: f32[32,4], index: 1, kind: input, shape index: {}]
  %s2 = inlined_call_operand.vmem [shape: f32[32,1], index: 2, kind: input, shape index: {}]
  %s3 = inlined_call_operand.vmem [shape: f32[2,32,32], index: 3, kind: input, shape index: {}]
  %s4 = inlined_call_operand.vmem [shape: f32[2,32,1], index: 4, kind: input, shape index: {}]
  %s5 = inlined_call_operand.vmem [shape: f32[24,32], index: 5, kind: input, shape index: {}]
  %s6 = inlined_call_operand.vmem [shape: f32[24,1], index: 6, kind: input, shape index: {}]
  %s7 = inlined_call_operand.hbm [shape: f32[24,128], index: 7, kind: output, shape index: {}]
  %s8 = sld [smem:[#allocation0]]
  $region38: #{tpu_custom_call.1} parent=0
    _
  %s10 = ssub.s32 1, %s8
  %s11 = scalar_select 0, %s10, %s8
  $region1: #{tpu_custom_call.1} parent=0
    #allocation2 [shape = 'u8[12288]{0}', space=vmem, size = 0x3000, scoped, tag = 'output window, operand 0, single buffered']
    #allocation3 [shape = 's32[1]{0}', space=sflag, size = 0x4, scoped, tag = 'scoped memory for tpu_custom_call.1']
    %12 = vsyncpa [#allocation3], 0
    // Predicated region
    $region2: #{tpu_custom_call.1} parent=1 // pred_check
      _
    $region3: #{tpu_custom_call.1} parent=1 // pred_check_branch
      %14 = sbr.rel (0) target = $region5
    $region4: #{tpu_custom_call.1} parent=1 // pred_region
      _
    $region5: #{tpu_custom_call.1} parent=1 // pred_fallthru
      _
    // Predicated region
    $region6: #{tpu_custom_call.1} parent=1 // pred_check
      _
    $region7: #{tpu_custom_call.1} parent=1 // pred_check_branch
      %16 = sbr.rel (0) target = $region9
    $region8: #{tpu_custom_call.1} parent=1 // pred_region
      _
    $region9: #{tpu_custom_call.1} parent=1 // pred_fallthru
      _
    // Predicated region
    $region10: #{tpu_custom_call.1} parent=1 // pred_check
      _
    $region11: #{tpu_custom_call.1} parent=1 // pred_check_branch
      %18 = sbr.rel (0) target = $region13
    $region12: #{tpu_custom_call.1} parent=1 // pred_region
      _
    $region13: #{tpu_custom_call.1} parent=1 // pred_fallthru
      _
    // Predicated region
    $region14: #{tpu_custom_call.1} parent=1 // pred_check
      _
    $region15: #{tpu_custom_call.1} parent=1 // pred_check_branch
      %20 = sbr.rel (0) target = $region17
    $region16: #{tpu_custom_call.1} parent=1 // pred_region
      _
    $region17: #{tpu_custom_call.1} parent=1 // pred_fallthru
      _
    // Predicated region
    $region18: #{tpu_custom_call.1} parent=1 // pred_check
      _
    $region19: #{tpu_custom_call.1} parent=1 // pred_check_branch
      %22 = sbr.rel (0) target = $region21
    $region20: #{tpu_custom_call.1} parent=1 // pred_region
      _
    $region21: #{tpu_custom_call.1} parent=1 // pred_fallthru
      _
    // Predicated region
    $region22: #{tpu_custom_call.1} parent=1 // pred_check
      _
    $region23: #{tpu_custom_call.1} parent=1 // pred_check_branch
      %24 = sbr.rel (0) target = $region25
    $region24: #{tpu_custom_call.1} parent=1 // pred_region
      _
    $region25: #{tpu_custom_call.1} parent=1 // pred_fallthru
      _
    // Predicated region
    $region26: #{tpu_custom_call.1} parent=1 // pred_check
      _
    $region27: #{tpu_custom_call.1} parent=1 // pred_check_branch
      %26 = sbr.rel (0) target = $region29
    $region28: #{tpu_custom_call.1} parent=1 // pred_region
      _
    $region29: #{tpu_custom_call.1} parent=1 // pred_fallthru
      _
    %v27 = vld [vmem:[%s1] sm:$0xff]
    %v28 = vld [vmem:[%s1 + $0x8] sm:$0xff]
    %v29 = vld [vmem:[%s1 + $0x10] sm:$0xff]
    %v30 = vld [vmem:[%s1 + $0x18] sm:$0xff]
    %v31 = vld [vmem:[%s0] sm:$0xf]
    %v32 = vld [vmem:[%s2] sm:$0xff]
    %v33 = vld [vmem:[%s2 + $0x8] sm:$0xff]
    %v34 = vld [vmem:[%s2 + $0x10] sm:$0xff]
    %v35 = vld [vmem:[%s2 + $0x18] sm:$0xff]
    %37 = vset.pattern.permute.xlu0 0
    %38 = vperm.xlu0 %37, %v32
    %v39 = vpop.permute.xlu0 %38
    %42 = vset.pattern.permute.xlu0 0
    %43 = vperm.xlu0 %42, %v33
    %v44 = vpop.permute.xlu0 %43
    %47 = vset.pattern.permute.xlu0 0
    %48 = vperm.xlu0 %47, %v34
    %v49 = vpop.permute.xlu0 %48
    %52 = vset.pattern.permute.xlu0 0
    %53 = vperm.xlu0 %52, %v35
    %v54 = vpop.permute.xlu0 %53
    %vm56 = vcmask 31744
    %v58 = vsel %vm56, %v27, 0
    %v61 = vsel %vm56, %v28, 0
    %v64 = vsel %vm56, %v29, 0
    %v67 = vsel %vm56, %v30, 0
    %vm69 = vcmask 1043456
    %v71 = vsel %vm69, %v31, 0
    %73 = vmatpush.msra.mxu0 0.0
    %74 = vmatpush.msra.mxu0 0.0
    %75 = vmatpush.msra.mxu0 0.0
    %76 = vmatpush.msra.mxu0 0.0
    %77 = vmatpush.msra.mxu0 0.0
    %78 = vmatpush.msra.mxu0 0.0
    %79 = vmatpush.msra.mxu0 0.0
    %80 = vmatpush.msra.mxu0 0.0
    %81 = vmatpush.msra.mxu0 0.0
    %82 = vmatpush.msra.mxu0 0.0
    %83 = vmatpush.msra.mxu0 0.0
    %84 = vmatpush.msra.mxu0 0.0
    %85 = vmatpush.msra.mxu0 0.0
    %86 = vmatpush.msra.mxu0 0.0
    %87 = vmatpush.msra.mxu0 0.0
    %88 = vmatpush.msra.mxu0 %v71
    %89 = vmatmul.f32.gmra.mxu0 %v58
    %v90 = vpop.f32.mrf.mxu0
    %v91 = vadd.f32 %v39, %v90
    %92 = vmatmul.f32.gmra.mxu0 %v61
    %v93 = vpop.f32.mrf.mxu0
    %v94 = vadd.f32 %v44, %v93
    %95 = vmatmul.f32.gmra.mxu0 %v64
    %v96 = vpop.f32.mrf.mxu0
    %v97 = vadd.f32 %v49, %v96
    %98 = vmatmul.f32.gmra.mxu0 %v67
    %v99 = vpop.f32.mrf.mxu0
    %v100 = vadd.f32 %v54, %v99
    %101 = vdwg.mxu0
    %v102 = vmax.f32 %v91, 0.0
    %v103 = vmax.f32 %v94, 0.0
    %v104 = vmax.f32 %v97, 0.0
    %v105 = vmax.f32 %v100, 0.0
    %v106 = vld [vmem:[%s3] sm:$0xff]
    %v107 = vld [vmem:[%s3 + $0x8] sm:$0xff]
    %v108 = vld [vmem:[%s3 + $0x10] sm:$0xff]
    %v109 = vld [vmem:[%s3 + $0x18] sm:$0xff]
    %v110 = vld [vmem:[%s4] sm:$0xff]
    %v111 = vld [vmem:[%s4 + $0x8] sm:$0xff]
    %v112 = vld [vmem:[%s4 + $0x10] sm:$0xff]
    %v113 = vld [vmem:[%s4 + $0x18] sm:$0xff]
    %115 = vset.pattern.permute.xlu0 0
    %116 = vperm.xlu0 %115, %v110
    %v117 = vpop.permute.xlu0 %116
    %120 = vset.pattern.permute.xlu0 0
    %121 = vperm.xlu0 %120, %v111
    %v122 = vpop.permute.xlu0 %121
    %125 = vset.pattern.permute.xlu0 0
    %126 = vperm.xlu0 %125, %v112
    %v127 = vpop.permute.xlu0 %126
    %130 = vset.pattern.permute.xlu0 0
    %131 = vperm.xlu0 %130, %v113
    %v132 = vpop.permute.xlu0 %131
    %vm134 = vcmask 261120
    %v136 = vsel %vm134, %v106, 0
    %v139 = vsel %vm134, %v107, 0
    %v142 = vsel %vm134, %v108, 0
    %v145 = vsel %vm134, %v109, 0
    %147 = vmatpush.msra.mxu0 0.0
    %148 = vmatpush.msra.mxu0 0.0
    %149 = vmatpush.msra.mxu0 0.0
    %150 = vmatpush.msra.mxu0 0.0
    %151 = vmatpush.msra.mxu0 0.0
    %152 = vmatpush.msra.mxu0 0.0
    %153 = vmatpush.msra.mxu0 0.0
    %154 = vmatpush.msra.mxu0 0.0
    %155 = vmatpush.msra.mxu0 0.0
    %156 = vmatpush.msra.mxu0 0.0
    %157 = vmatpush.msra.mxu0 0.0
    %158 = vmatpush.msra.mxu0 0.0
    %159 = vmatpush.msra.mxu0 %v105
    %160 = vmatpush.msra.mxu0 %v104
    %161 = vmatpush.msra.mxu0 %v103
    %162 = vmatpush.msra.mxu0 %v102
    %163 = vmatmul.f32.gmra.mxu0 %v136
    %v164 = vpop.f32.mrf.mxu0
    %v165 = vadd.f32 %v117, %v164
    %166 = vmatmul.f32.gmra.mxu0 %v139
    %v167 = vpop.f32.mrf.mxu0
    %v168 = vadd.f32 %v122, %v167
    %169 = vmatmul.f32.gmra.mxu0 %v142
    %v170 = vpop.f32.mrf.mxu0
    %v171 = vadd.f32 %v127, %v170
    %172 = vmatmul.f32.gmra.mxu0 %v145
    %v173 = vpop.f32.mrf.mxu0
    %v174 = vadd.f32 %v132, %v173
    %175 = vdwg.mxu0
    %v176 = vmax.f32 %v165, 0.0
    %v177 = vmax.f32 %v168, 0.0
    %v178 = vmax.f32 %v171, 0.0
    %v179 = vmax.f32 %v174, 0.0
    %s180 = scalar_lea.vmem %s3, 32
    %v181 = vld [vmem:[%s180] sm:$0xff]
    %v182 = vld [vmem:[%s180 + $0x8] sm:$0xff]
    %v183 = vld [vmem:[%s180 + $0x10] sm:$0xff]
    %v184 = vld [vmem:[%s180 + $0x18] sm:$0xff]
    %s185 = scalar_lea.vmem %s4, 32
    %v186 = vld [vmem:[%s185] sm:$0xff]
    %v187 = vld [vmem:[%s185 + $0x8] sm:$0xff]
    %v188 = vld [vmem:[%s185 + $0x10] sm:$0xff]
    %v189 = vld [vmem:[%s185 + $0x18] sm:$0xff]
    %191 = vset.pattern.permute.xlu0 0
    %192 = vperm.xlu0 %191, %v186
    %v193 = vpop.permute.xlu0 %192
    %196 = vset.pattern.permute.xlu0 0
    %197 = vperm.xlu0 %196, %v187
    %v198 = vpop.permute.xlu0 %197
    %201 = vset.pattern.permute.xlu0 0
    %202 = vperm.xlu0 %201, %v188
    %v203 = vpop.permute.xlu0 %202
    %206 = vset.pattern.permute.xlu0 0
    %207 = vperm.xlu0 %206, %v189
    %v208 = vpop.permute.xlu0 %207
    %v211 = vsel %vm134, %v181, 0
    %v214 = vsel %vm134, %v182, 0
    %v217 = vsel %vm134, %v183, 0
    %v220 = vsel %vm134, %v184, 0
    %222 = vmatpush.msra.mxu0 0.0
    %223 = vmatpush.msra.mxu0 0.0
    %224 = vmatpush.msra.mxu0 0.0
    %225 = vmatpush.msra.mxu0 0.0
    %226 = vmatpush.msra.mxu0 0.0
    %227 = vmatpush.msra.mxu0 0.0
    %228 = vmatpush.msra.mxu0 0.0
    %229 = vmatpush.msra.mxu0 0.0
    %230 = vmatpush.msra.mxu0 0.0
    %231 = vmatpush.msra.mxu0 0.0
    %232 = vmatpush.msra.mxu0 0.0
    %233 = vmatpush.msra.mxu0 0.0
    %234 = vmatpush.msra.mxu0 %v179
    %235 = vmatpush.msra.mxu0 %v178
    %236 = vmatpush.msra.mxu0 %v177
    %237 = vmatpush.msra.mxu0 %v176
    %238 = vmatmul.f32.gmra.mxu0 %v211
    %v239 = vpop.f32.mrf.mxu0
    %v240 = vadd.f32 %v193, %v239
    %241 = vmatmul.f32.gmra.mxu0 %v214
    %v242 = vpop.f32.mrf.mxu0
    %v243 = vadd.f32 %v198, %v242
    %244 = vmatmul.f32.gmra.mxu0 %v217
    %v245 = vpop.f32.mrf.mxu0
    %v246 = vadd.f32 %v203, %v245
    %247 = vmatmul.f32.gmra.mxu0 %v220
    %v248 = vpop.f32.mrf.mxu0
    %v249 = vadd.f32 %v208, %v248
    %250 = vdwg.mxu0
    %v251 = vmax.f32 %v240, 0.0
    %v252 = vmax.f32 %v243, 0.0
    %v253 = vmax.f32 %v246, 0.0
    %v254 = vmax.f32 %v249, 0.0
    %v255 = vld [vmem:[%s5] sm:$0xff]
    %v256 = vld [vmem:[%s5 + $0x8] sm:$0xff]
    %v257 = vld [vmem:[%s5 + $0x10] sm:$0xff]
    %v258 = vld [vmem:[%s6] sm:$0xff]
    %v259 = vld [vmem:[%s6 + $0x8] sm:$0xff]
    %v260 = vld [vmem:[%s6 + $0x10] sm:$0xff]
    %262 = vset.pattern.permute.xlu0 0
    %263 = vperm.xlu0 %262, %v258
    %v264 = vpop.permute.xlu0 %263
    %267 = vset.pattern.permute.xlu0 0
    %268 = vperm.xlu0 %267, %v259
    %v269 = vpop.permute.xlu0 %268
    %272 = vset.pattern.permute.xlu0 0
    %273 = vperm.xlu0 %272, %v260
    %v274 = vpop.permute.xlu0 %273
    %v277 = vsel %vm134, %v255, 0
    %v280 = vsel %vm134, %v256, 0
    %v283 = vsel %vm134, %v257, 0
    %285 = vmatpush.msra.mxu0 0.0
    %286 = vmatpush.msra.mxu0 0.0
    %287 = vmatpush.msra.mxu0 0.0
    %288 = vmatpush.msra.mxu0 0.0
    %289 = vmatpush.msra.mxu0 0.0
    %290 = vmatpush.msra.mxu0 0.0
    %291 = vmatpush.msra.mxu0 0.0
    %292 = vmatpush.msra.mxu0 0.0
    %293 = vmatpush.msra.mxu0 0.0
    %294 = vmatpush.msra.mxu0 0.0
    %295 = vmatpush.msra.mxu0 0.0
    %296 = vmatpush.msra.mxu0 0.0
    %297 = vmatpush.msra.mxu0 %v254
    %298 = vmatpush.msra.mxu0 %v253
    %299 = vmatpush.msra.mxu0 %v252
    %300 = vmatpush.msra.mxu0 %v251
    %301 = vmatmul.f32.gmra.mxu0 %v277
    %v302 = vpop.f32.mrf.mxu0
    %v303 = vadd.f32 %v264, %v302
    %304 = vmatmul.f32.gmra.mxu0 %v280
    %v305 = vpop.f32.mrf.mxu0
    %v306 = vadd.f32 %v269, %v305
    %307 = vmatmul.f32.gmra.mxu0 %v283
    %v308 = vpop.f32.mrf.mxu0
    %v309 = vadd.f32 %v274, %v308
    %310 = vdwg.mxu0
    %311 = vst [vmem:[#allocation2] sm:$0xff] %v303
    %312 = vst [vmem:[#allocation2 + $0x8] sm:$0xff] %v306
    %313 = vst [vmem:[#allocation2 + $0x10] sm:$0xff] %v309
    // Predicated region
    $region30: #{tpu_custom_call.1} parent=1 // pred_check
      _
    $region31: #{tpu_custom_call.1} parent=1 // pred_check_branch
      %315 = sbr.rel (0) target = $region33
    $region32: #{tpu_custom_call.1} parent=1 // pred_region
      %317 = vsyncadd [#allocation3], 0
      %s318 = sshll.u32 [#allocation2], 4
      %s319 = int_to_ptr.vmem [resolvable:$true] %s318
      %s320 = sshll.u32 %s7, 4
      %s321 = int_to_ptr.hbm [resolvable:$true] %s320
      %326 = dma.vmem_to_hbm [thread:$0]  %s319, 384, %s321, [#allocation3], 128, 128, 8
    $region33: #{tpu_custom_call.1} parent=1 // pred_fallthru
      _
    // Predicated region
    $region34: #{tpu_custom_call.1} parent=1 // pred_check
      _
    $region35: #{tpu_custom_call.1} parent=1 // pred_check_branch
      %328 = sbr.rel (0) target = $region37
    $region36: #{tpu_custom_call.1} parent=1 // pred_region
      %330 = dma.done [#allocation3], 384
    $region37: #{tpu_custom_call.1} parent=1 // pred_fallthru
      _
    %331 = vsyncpa [#allocation3], 1

</llo_original>
